<compile_context>
chip_gen: v7x
topology: tpu7x:2x2x1
jax: 0.10.0
libtpu: 0.0.40
codegen_flags: <defaults>
</compile_context>

<pallas_src>
import functools

import jax
import jax.numpy as jnp
from jax.experimental import pallas as pl
from jax.experimental.pallas import tpu as pltpu


# ---------------------------------------------------------------------------
# global (min, max) reduction  (stats for scale_quantize)
# ---------------------------------------------------------------------------

_MM_LANES = 512   # lane dim, multiple of 128
_MM_ROWS = 64     # sublane rows per grid step -> 128 KiB f32 block


def _minmax_kernel(x_ref, min_ref, max_ref, mn_acc, mx_acc):
    i = pl.program_id(0)
    blk = x_ref[...]
    bmin = jnp.min(blk, axis=0, keepdims=True)   # (1, LANES) sublane reduce
    bmax = jnp.max(blk, axis=0, keepdims=True)

    @pl.when(i == 0)
    def _():
        mn_acc[...] = bmin
        mx_acc[...] = bmax

    @pl.when(i > 0)
    def _():
        mn_acc[...] = jnp.minimum(mn_acc[...], bmin)
        mx_acc[...] = jnp.maximum(mx_acc[...], bmax)

    @pl.when(i == pl.num_programs(0) - 1)
    def _():
        min_ref[...] = mn_acc[...]
        max_ref[...] = mx_acc[...]


def _min_max(x):
    """Tiled, pipelined global (min, max) of an arbitrary-shaped array."""
    xf = jnp.asarray(x, jnp.float32).reshape(-1)
    tile = _MM_LANES * _MM_ROWS
    pad = (-xf.size) % tile
    if pad:
        # edge padding repeats an existing value -> does not change min/max
        xf = jnp.pad(xf, (0, pad), mode="edge")
    x2d = xf.reshape(-1, _MM_LANES)
    grid = (x2d.shape[0] // _MM_ROWS,)
    mn, mx = pl.pallas_call(
        _minmax_kernel,
        out_shape=(jax.ShapeDtypeStruct((1, _MM_LANES), jnp.float32),
                   jax.ShapeDtypeStruct((1, _MM_LANES), jnp.float32)),
        grid=grid,
        in_specs=[pl.BlockSpec((_MM_ROWS, _MM_LANES), lambda i: (i, 0))],
        out_specs=(pl.BlockSpec((1, _MM_LANES), lambda i: (0, 0)),
                   pl.BlockSpec((1, _MM_LANES), lambda i: (0, 0))),
        scratch_shapes=[pltpu.VMEM((1, _MM_LANES), jnp.float32),
                        pltpu.VMEM((1, _MM_LANES), jnp.float32)],
        compiler_params=pltpu.CompilerParams(
            dimension_semantics=("arbitrary",)),
    )(x2d)
    # final 512-element lane reduce is negligible; do it outside the kernel.
    return jnp.min(mn), jnp.max(mx)


def _scale_zero_point(x, n_levels):
    """Device-side (S, Z) of scale_quantize (quantized tensor is unused in fwd)."""
    mn, mx = _min_max(x)
    s = (mx - mn) / n_levels
    z = jnp.round(n_levels * mn / (mn - mx))
    return s, z


# ---------------------------------------------------------------------------
# tiled linear kernels
# ---------------------------------------------------------------------------

def _linear_kernel(x_ref, w_ref, b_ref, o_ref, acc_ref):
    """out = x @ w_t + b  (calibration branch), K tiled along grid axis 2."""
    k = pl.program_id(2)

    @pl.when(k == 0)
    def _():
        acc_ref[...] = jnp.zeros_like(acc_ref)

    acc_ref[...] += jnp.dot(x_ref[...].astype(jnp.float32),
                            w_ref[...].astype(jnp.float32),
                            preferred_element_type=jnp.float32)

    @pl.when(k == pl.num_programs(2) - 1)
    def _():
        o_ref[...] = (acc_ref[...] + b_ref[...]).astype(o_ref.dtype)


def _qlinear_kernel(scal_ref, x_ref, qw_ref, qwsum_ref, b_ref, o_ref,
                    acc_ref, rsum_ref, *, z1, n_levels, k_total, mxu_dtype):
    """Fused ScaleQuant quantized branch.

    scal_ref (SMEM, f32[3]) = [S2, Z2, S1*S2]  -- runtime scalars, no recompile.
    """
    k = pl.program_id(2)

    @pl.when(k == 0)
    def _():
        acc_ref[...] = jnp.zeros_like(acc_ref)
        rsum_ref[...] = jnp.zeros_like(rsum_ref)

    s2 = scal_ref[0]
    z2 = scal_ref[1]
    x = x_ref[...].astype(jnp.float32)
    # xq = clamp(round(x / S2 + Z2), 0, 2^bits - 1)   (torch.round == ties-to-even)
    xq = jnp.clip(jnp.round(x / s2 + z2), 0.0, n_levels)

    # integer-valued operands <= 2^bits-1 are exact in bf16 (bits <= 8)
    acc_ref[...] += jnp.dot(xq.astype(mxu_dtype), qw_ref[...],
                            preferred_element_type=jnp.float32)
    rsum_ref[...] += jnp.sum(xq, axis=1, keepdims=True)

    @pl.when(k == pl.num_programs(2) - 1)
    def _():
        s1s2 = scal_ref[2]
        qb = jnp.round(b_ref[...] / s1s2)                      # (1, tn)
        corr = z2 * qwsum_ref[...] + z1 * rsum_ref[...]        # (tm, tn) broadcast
        o_ref[...] = (s1s2 * (acc_ref[...] + qb - corr
                              + z1 * z2 * k_total)).astype(o_ref.dtype)


# ---------------------------------------------------------------------------
# wrappers
# ---------------------------------------------------------------------------

_DEF_BM, _DEF_BN, _DEF_BK = 256, 256, 512          # sized well under v7x 64 MiB VMEM
_VMEM_LIMIT = 32 * 1024 * 1024


def _pick_tile(dim, preferred, align):
    """Largest legal tile <= preferred that divides dim (falls back to full dim)."""
    if dim <= preferred:
        return dim
    t = (preferred // align) * align
    while t >= align:
        if dim % t == 0:
            return t
        t -= align
    return dim      # full-dim block is always layout-legal


def _matmul_params(M, N, K, bm, bn, bk):
    tm = _pick_tile(M, bm, 8)
    tn = _pick_tile(N, bn, 128)
    tk = _pick_tile(K, bk, 128)
    return tm, tn, tk, (M // tm, N // tn, K // tk)


def _compiler_params():
    return pltpu.CompilerParams(
        dimension_semantics=("parallel", "parallel", "arbitrary"),
        vmem_limit_bytes=_VMEM_LIMIT)


def _tiled_linear(x2d, w_t, bias2d, *, bm=_DEF_BM, bn=_DEF_BN, bk=_DEF_BK):
    M, K = x2d.shape
    _, N = w_t.shape
    tm, tn, tk, grid = _matmul_params(M, N, K, bm, bn, bk)
    gs = pltpu.PrefetchScalarGridSpec(
        num_scalar_prefetch=0, grid=grid,
        in_specs=[pl.BlockSpec((tm, tk), lambda i, j, k: (i, k)),
                  pl.BlockSpec((tk, tn), lambda i, j, k: (k, j)),
                  pl.BlockSpec((1, tn), lambda i, j, k: (0, j))],
        out_specs=pl.BlockSpec((tm, tn), lambda i, j, k: (i, j)),
        scratch_shapes=[pltpu.VMEM((tm, tn), jnp.float32)])
    return pl.pallas_call(
        _linear_kernel,
        out_shape=jax.ShapeDtypeStruct((M, N), x2d.dtype),
        grid_spec=gs,
        compiler_params=_compiler_params(),
        cost_estimate=pl.CostEstimate(
            flops=2 * M * N * K, transcendentals=0,
            bytes_accessed=4 * (M * K + K * N + N + M * N)),
    )(x2d, w_t, bias2d)


def _tiled_qlinear(x2d, qw_t, qw_sum, bias2d, scalars, *, z1, n_levels,
                   bm=_DEF_BM, bn=_DEF_BN, bk=_DEF_BK):
    M, K = x2d.shape
    _, N = qw_t.shape
    tm, tn, tk, grid = _matmul_params(M, N, K, bm, bn, bk)
    kernel = functools.partial(
        _qlinear_kernel, z1=float(z1), n_levels=float(n_levels),
        k_total=float(K), mxu_dtype=qw_t.dtype)
    gs = pltpu.PrefetchScalarGridSpec(
        num_scalar_prefetch=1, grid=grid,
        in_specs=[pl.BlockSpec((tm, tk), lambda i, j, k, s: (i, k)),
                  pl.BlockSpec((tk, tn), lambda i, j, k, s: (k, j)),
                  pl.BlockSpec((1, tn), lambda i, j, k, s: (0, j)),
                  pl.BlockSpec((1, tn), lambda i, j, k, s: (0, j))],
        out_specs=pl.BlockSpec((tm, tn), lambda i, j, k, s: (i, j)),
        scratch_shapes=[pltpu.VMEM((tm, tn), jnp.float32),
                        pltpu.VMEM((tm, 1), jnp.float32)])
    return pl.pallas_call(
        kernel,
        out_shape=jax.ShapeDtypeStruct((M, N), x2d.dtype),
        grid_spec=gs,
        compiler_params=_compiler_params(),
        cost_estimate=pl.CostEstimate(
            flops=2 * M * N * K, transcendentals=0,
            bytes_accessed=4 * M * K + qw_t.dtype.itemsize * K * N
                           + 4 * (2 * N + M * N)),
    )(scalars, x2d, qw_t, qw_sum, bias2d)


# ---------------------------------------------------------------------------
# module port
# ---------------------------------------------------------------------------

class ScaleQuantLinearPallas:
    """JAX/Pallas port of ScaleQuant wrapping an nn.Linear."""

    def __init__(self, name, bits, weight, bias, counter=10):
        # TODO(synk): bits == 1 uses the torch.sign path of scale_quantize, which
        # the original module cannot even unpack; unsupported here as well.
        assert bits >= 2, "bits must be >= 2"
        self.name = name
        self.bits = bits
        self._counter = counter
        self.max_cnt = counter
        self.n_levels = float(2.0 ** bits - 1.0)

        w = jnp.asarray(weight, jnp.float32)              # (out_f, in_f)
        b = jnp.asarray(bias, jnp.float32)                # (out_f,)
        self.out_features, self.in_features = w.shape
        self.weight = w
        self.bias = b
        self.w_t = jnp.transpose(w)                       # (in_f, out_f) lane-dense RHS
        self.bias2d = b.reshape(1, -1)

        # --- one-time weight quantization (scale_quantize(weight, bits)) ---
        # Single host sync at construction only; forward never syncs.
        wmin, wmax = _min_max(w)
        wmin = float(wmin)
        wmax = float(wmax)
        self.S1 = (wmax - wmin) / self.n_levels
        self.Z1 = float(round(self.n_levels * wmin / (wmin - wmax)))
        qw = jnp.round((w - wmin) / (wmax - wmin) * self.n_levels)   # ints in [0, n]
        # bits <= 8 -> values <= 255 are exact in bf16 -> bf16 MXU path is exact.
        mxu_dtype = jnp.bfloat16 if self.n_levels <= 256 else jnp.float32
        self.qw_t = jnp.transpose(qw).astype(mxu_dtype)   # (in_f, out_f)
        self.qw_sum = jnp.sum(qw, axis=1).reshape(1, -1)  # (1, out_f) = sum_k qW[o, k]

        # calibration running stats as DEVICE scalars (reach kernels via SMEM)
        self.S2 = jnp.float32(0.0)
        self.Z2 = jnp.float32(0.0)
        self.S3 = jnp.float32(0.0)
        self.Z3 = jnp.float32(0.0)

    @property
    def counter(self):
        return self._counter

    def __call__(self, x, *, bm=_DEF_BM, bn=_DEF_BN, bk=_DEF_BK):
        lead = x.shape[:-1]
        x2d = jnp.asarray(x).reshape(-1, self.in_features)

        if self._counter > 0:
            # ------------------ calibration branch ------------------
            self._counter -= 1
            s2, z2 = _scale_zero_point(x2d, self.n_levels)
            m = float(self.max_cnt - self._counter)
            self.S2 = (s2 + self.S2 * m) / (m + 1.0)
            self.Z2 = jnp.round((z2 + self.Z2 * m) / (m + 1.0))
            out = _tiled_linear(x2d, self.w_t, self.bias2d, bm=bm, bn=bn, bk=bk)
            self.S3, self.Z3 = _scale_zero_point(out, self.n_levels)
        else:
            # ------------------ quantized branch ------------------
            # (PyTorch also computes an unused `output_unquant`; skipped here.)
            s1s2 = jnp.float32(self.S1) * self.S2
            scalars = jnp.stack(
                [jnp.asarray(self.S2, jnp.float32),
                 jnp.asarray(self.Z2, jnp.float32),
                 jnp.asarray(s1s2, jnp.float32)])
            out = _tiled_qlinear(x2d, self.qw_t, self.qw_sum, self.bias2d,
                                 scalars, z1=self.Z1, n_levels=self.n_levels,
                                 bm=bm, bn=bn, bk=bk)
        return out.reshape(*lead, self.out_features)


# ---------------------------------------------------------------------------
# references / demo
# ---------------------------------------------------------------------------

def _ref_plain_linear(x2d, w, b):
    return jnp.dot(x2d, w.T, precision=jax.lax.Precision.HIGHEST) + b


def _ref_scalequant_forward(x2d, b, qw, S1, Z1, S2, Z2, bits):
    """Literal jnp mirror of the PyTorch quantized branch (4-matmul form)."""
    hi = jax.lax.Precision.HIGHEST
    n = 2.0 ** bits - 1.0
    xq = jnp.clip(jnp.round(x2d / S2 + Z2), 0.0, n)
    qb = jnp.round(b / (S1 * S2))
    q1q2 = jnp.dot(xq, qw.T, precision=hi) + qb
    q1z2 = jnp.dot(Z2 * jnp.ones_like(x2d), qw.T, precision=hi)
    q2z1 = jnp.dot(xq, (Z1 * jnp.ones_like(qw)).T, precision=hi)
    z1z2 = jnp.dot(jnp.ones_like(x2d), (Z1 * Z2 * jnp.ones_like(qw)).T, precision=hi)
    return S1 * S2 * (q1q2 - (q1z2 + q2z1) + z1z2)


if __name__ == "__main__":
    key = jax.random.PRNGKey(0)
    k_w, k_b, k_x = jax.random.split(key, 3)

    batch, seq, in_f, out_f = 2, 8, 256, 256
    weight = 0.1 * jax.random.normal(k_w, (out_f, in_f), jnp.float32)
    bias = 0.1 * jax.random.normal(k_b, (out_f,), jnp.float32)
    x = jax.random.normal(k_x, (batch, seq, in_f), jnp.float32)

    layer = ScaleQuantLinearPallas("fc", bits=8, weight=weight, bias=bias,
                                   counter=1)

    # small blocks so the demo exercises the full (i, j, k) pipeline: grid (2,2,2)
    bm, bn, bk = 8, 128, 128

    # ---- calibration pass (counter > 0): plain linear + S2/Z2/S3/Z3 stats ----
    y_cal = layer(x, bm=bm, bn=bn, bk=bk)
    jax.block_until_ready(y_cal)
    ref_cal = _ref_plain_linear(x.reshape(-1, in_f), weight, bias)
    # loose-ish tolerance: MXU f32 path vs XLA reference accumulation ordering
    assert jnp.allclose(y_cal.reshape(-1, out_f), ref_cal,
                        atol=2e-2, rtol=1e-2), "calibration (plain linear) mismatch"

    # ---- quantized pass (counter == 0) ----
    y_q = layer(x, bm=bm, bn=bn, bk=bk)
    jax.block_until_ready(y_q)
    qw_f32 = jnp.transpose(layer.qw_t).astype(jnp.float32)   # exact int values
    ref_q = _ref_scalequant_forward(x.reshape(-1, in_f), bias, qw_f32,
                                    layer.S1, layer.Z1, layer.S2, layer.Z2,
                                    layer.bits)
    assert jnp.allclose(y_q.reshape(-1, out_f), ref_q,
                        atol=2e-2, rtol=2e-3), "quantized branch mismatch"

    print("KERNEL_OK")
</pallas_src>

<mosaic_0001>
module attributes {stable_mosaic.version = 11 : i64} {
  func.func @_minmax_kernel(%arg0: i32, %arg1: memref<64x512xf32, #tpu.memory_space<vmem>>, %arg2: memref<1x512xf32, #tpu.memory_space<vmem>>, %arg3: memref<1x512xf32, #tpu.memory_space<vmem>>, %arg4: memref<1x512xf32, #tpu.memory_space<vmem>>, %arg5: memref<1x512xf32, #tpu.memory_space<vmem>>) attributes {dimension_semantics = [#tpu.dimension_semantics<arbitrary>], iteration_bounds = array<i64: 2>, scalar_prefetch = 0 : i64, scratch_operands = 2 : i64, tpu.core_type = #tpu.core_type<tc>, window_params = [{transform_indices = @transform_0, window_bounds = array<i64: 64, 512>}, {pipeline_mode = #tpu.pipeline_mode<synchronous>, transform_indices = @transform_1, window_bounds = array<i64: 1, 512>}, {pipeline_mode = #tpu.pipeline_mode<synchronous>, transform_indices = @transform_2, window_bounds = array<i64: 1, 512>}]} {
    %c0 = arith.constant 0 : index
    %c0_0 = arith.constant 0 : index
    %0 = vector.load %arg1[%c0, %c0_0] : memref<64x512xf32, #tpu.memory_space<vmem>>, vector<64x512xf32>
    %cst = arith.constant dense<0x7F800000> : vector<512xf32>
    %1 = vector.multi_reduction <minimumf>, %0, %cst [0] : vector<64x512xf32> to vector<512xf32>
    %2 = vector.shape_cast %1 : vector<512xf32> to vector<1x512xf32>
    %cst_1 = arith.constant dense<0xFF800000> : vector<512xf32>
    %3 = vector.multi_reduction <maximumf>, %0, %cst_1 [0] : vector<64x512xf32> to vector<512xf32>
    %4 = vector.shape_cast %3 : vector<512xf32> to vector<1x512xf32>
    %c0_i32 = arith.constant 0 : i32
    %5 = arith.cmpi eq, %arg0, %c0_i32 : i32
    %6 = arith.extui %5 : i1 to i32
    %c0_i32_2 = arith.constant 0 : i32
    %7 = arith.cmpi ne, %6, %c0_i32_2 : i32
    scf.if %7 {
      %c0_6 = arith.constant 0 : index
      %c0_7 = arith.constant 0 : index
      %14 = vector.load %arg4[%c0_6, %c0_7] : memref<1x512xf32, #tpu.memory_space<vmem>>, vector<1x512xf32>
      tpu.vector_store %arg4[%c0_6, %c0_7], %2 {strides = array<i32>} : memref<1x512xf32, #tpu.memory_space<vmem>>, vector<1x512xf32>,
      %c0_8 = arith.constant 0 : index
      %c0_9 = arith.constant 0 : index
      %15 = vector.load %arg5[%c0_8, %c0_9] : memref<1x512xf32, #tpu.memory_space<vmem>>, vector<1x512xf32>
      tpu.vector_store %arg5[%c0_8, %c0_9], %4 {strides = array<i32>} : memref<1x512xf32, #tpu.memory_space<vmem>>, vector<1x512xf32>,
    } else {
    }
    %c0_i32_3 = arith.constant 0 : i32
    %8 = arith.cmpi sgt, %arg0, %c0_i32_3 : i32
    %9 = arith.extui %8 : i1 to i32
    %c0_i32_4 = arith.constant 0 : i32
    %10 = arith.cmpi ne, %9, %c0_i32_4 : i32
    scf.if %10 {
      %c0_6 = arith.constant 0 : index
      %c0_7 = arith.constant 0 : index
      %14 = vector.load %arg4[%c0_6, %c0_7] : memref<1x512xf32, #tpu.memory_space<vmem>>, vector<1x512xf32>
      %15 = arith.minimumf %14, %2 : vector<1x512xf32>
      %c0_8 = arith.constant 0 : index
      %c0_9 = arith.constant 0 : index
      %16 = vector.load %arg4[%c0_8, %c0_9] : memref<1x512xf32, #tpu.memory_space<vmem>>, vector<1x512xf32>
      tpu.vector_store %arg4[%c0_8, %c0_9], %15 {strides = array<i32>} : memref<1x512xf32, #tpu.memory_space<vmem>>, vector<1x512xf32>,
      %c0_10 = arith.constant 0 : index
      %c0_11 = arith.constant 0 : index
      %17 = vector.load %arg5[%c0_10, %c0_11] : memref<1x512xf32, #tpu.memory_space<vmem>>, vector<1x512xf32>
      %18 = arith.maximumf %17, %4 : vector<1x512xf32>
      %c0_12 = arith.constant 0 : index
      %c0_13 = arith.constant 0 : index
      %19 = vector.load %arg5[%c0_12, %c0_13] : memref<1x512xf32, #tpu.memory_space<vmem>>, vector<1x512xf32>
      tpu.vector_store %arg5[%c0_12, %c0_13], %18 {strides = array<i32>} : memref<1x512xf32, #tpu.memory_space<vmem>>, vector<1x512xf32>,
    } else {
    }
    %c1_i32 = arith.constant 1 : i32
    %11 = arith.cmpi eq, %arg0, %c1_i32 : i32
    %12 = arith.extui %11 : i1 to i32
    %c0_i32_5 = arith.constant 0 : i32
    %13 = arith.cmpi ne, %12, %c0_i32_5 : i32
    scf.if %13 {
      %c0_6 = arith.constant 0 : index
      %c0_7 = arith.constant 0 : index
      %14 = vector.load %arg4[%c0_6, %c0_7] : memref<1x512xf32, #tpu.memory_space<vmem>>, vector<1x512xf32>
      %c0_8 = arith.constant 0 : index
      %c0_9 = arith.constant 0 : index
      %15 = vector.load %arg2[%c0_8, %c0_9] : memref<1x512xf32, #tpu.memory_space<vmem>>, vector<1x512xf32>
      tpu.vector_store %arg2[%c0_8, %c0_9], %14 {strides = array<i32>} : memref<1x512xf32, #tpu.memory_space<vmem>>, vector<1x512xf32>,
      %c0_10 = arith.constant 0 : index
      %c0_11 = arith.constant 0 : index
      %16 = vector.load %arg5[%c0_10, %c0_11] : memref<1x512xf32, #tpu.memory_space<vmem>>, vector<1x512xf32>
      %c0_12 = arith.constant 0 : index
      %c0_13 = arith.constant 0 : index
      %17 = vector.load %arg3[%c0_12, %c0_13] : memref<1x512xf32, #tpu.memory_space<vmem>>, vector<1x512xf32>
      tpu.vector_store %arg3[%c0_12, %c0_13], %16 {strides = array<i32>} : memref<1x512xf32, #tpu.memory_space<vmem>>, vector<1x512xf32>,
    } else {
    }
    return
  }
  func.func @transform_0(%arg0: i32) -> (i32, i32) {
    %c0_i32 = arith.constant 0 : i32
    %c0_i32_0 = arith.constant 0 : i32
    return %arg0, %c0_i32 : i32, i32
  }
  func.func @transform_1(%arg0: i32) -> (i32, i32) {
    %c0_i32 = arith.constant 0 : i32
    %c0_i32_0 = arith.constant 0 : i32
    %c0_i32_1 = arith.constant 0 : i32
    return %c0_i32, %c0_i32_0 : i32, i32
  }
  func.func @transform_2(%arg0: i32) -> (i32, i32) {
    %c0_i32 = arith.constant 0 : i32
    %c0_i32_0 = arith.constant 0 : i32
    %c0_i32_1 = arith.constant 0 : i32
    return %c0_i32, %c0_i32_0 : i32, i32
  }
}

</mosaic_0001>

<llo_original>
// kernel: tpu_custom_call.1
$region0: #{tpu_custom_call.1}
  #allocation0 [shape = 'u32[]', space=smem, size = 0x4, offset = 0x4, fixed_abs, tag = 'smem constant byte address 0x4 - core index']
  #allocation1 [shape = 'u32[144,128]{1,0:T(1,128)}', space=vmem, size = 0x12000, scoped, tag = 'internal scratch']
  #allocation2 [shape = 'f32[1,512]{1,0:T(1,128)}', space=vmem, size = 0x800, scoped, tag = 'scratch operand']
  #allocation3 [shape = 'f32[1,512]{1,0:T(1,128)}', space=vmem, size = 0x800, scoped, tag = 'scratch operand']
  %s0 = inlined_call_operand.hbm [shape: f32[128,512], index: 0, kind: input, shape index: {}]
  %s1 = inlined_call_operand.hbm [shape: f32[1,512], index: 1, kind: output, shape index: {0}]
  %s2 = inlined_call_operand.hbm [shape: f32[1,512], index: 2, kind: output, shape index: {1}]
  %3 = xla_tuple %s1, %s2
  %s4 = sld [smem:[#allocation0]]
  $region61: #{tpu_custom_call.1} parent=0
    _
  %s6 = ssub.s32 1, %s4
  %s7 = scalar_select 0, %s6, %s4
  $region1: #{tpu_custom_call.1} parent=0
    #allocation4 [shape = 'u8[262144]{0}', space=vmem, size = 0x40000, scoped, tag = 'input window, operand 0']
    #allocation5 [shape = 's32[2]{0}', space=sflag, size = 0x8, scoped, tag = 'scoped memory for tpu_custom_call.1']
    #allocation6 [shape = 's32[2]{0}', space=sflag, size = 0x8, scoped, tag = 'scoped memory for tpu_custom_call.1']
    #allocation7 [shape = 'u8[2048]{0}', space=vmem, size = 0x800, scoped, tag = 'output window, operand 0, single buffered']
    #allocation8 [shape = 'u8[2048]{0}', space=vmem, size = 0x800, scoped, tag = 'output window, operand 1, single buffered']
    #allocation9 [shape = 's32[1]{0}', space=sflag, size = 0x4, scoped, tag = 'scoped memory for tpu_custom_call.1']
    %8 = vsyncpa [#allocation5], 0
    %s9 = scalar_lea.sflag [#allocation5], 1
    %10 = vsyncpa %s9, 0
    %11 = vsyncpa [#allocation6], 0
    %12 = vsyncpa [#allocation9], 0
    loop: start=0, step=1, limit=4
    $region2: #{tpu_custom_call.1} parent=1 // loop_pre_header
      _
    $region3: #{tpu_custom_call.1} parent=1 // loop_header
      %s14 = sphi 0, %s18
      %p15 = scmp.ge.s32.totalorder %s14, 4
      %s24 = sphi 0, %s26
      %s27 = sphi 0, %s24
      %s28 = sphi 0, %s27
      %s44 = sphi 0, %s28
      %s48 = sphi 0, %s48
      %s50 = sphi 0, %s48
      %s51 = sphi 0, %s50
      %s65 = sphi 0, %s51
      %s69 = sphi 0, %s69
      %s71 = sphi 0, %s69
      %s72 = sphi 0, %s71
      %s86 = sphi 0, %s72
    $region4: #{tpu_custom_call.1} parent=1 // loop_header_branch
      %17 = sbr.rel (%p15) target = $region8
    $region5: #{tpu_custom_call.1} parent=1 // loop_body
      %s19 = ssub.s32 %s14, 1
      %s20 = ssub.s32 %s14, 2
      %s21 = sadd.s32 %s14, 1
      %s22 = ssub.s32 %s14, %s21
      %p23 = scmp.eq.s32.totalorder %s22, 0
      %s25 = sadd.s32 %s24, 1
      %s26 = scalar_select %p23, %s24, %s25
      %p29 = pneg %p23
      %p30 = scmp.eq.s32.totalorder %s14, 1
      %p31 = por %p29, %p30
      %p32 = scmp.ne.s32.totalorder %s24, %s27
      %p33 = scmp.eq.s32.totalorder %s14, 0
      %p34 = por %p32, %p33
      %p35 = scmp.ne.s32.totalorder %s24, %s27
      %p36 = scmp.eq.s32.totalorder %s19, 1
      %p37 = por %p35, %p36
      %p38 = scmp.ne.s32.totalorder %s27, %s28
      %p39 = scmp.eq.s32.totalorder %s19, 0
      %p40 = por %p38, %p39
      %p41 = scmp.ne.s32.totalorder %s27, %s28
      %p42 = scmp.eq.s32.totalorder %s20, 1
      %p43 = por %p41, %p42
      %p45 = scmp.ne.s32.totalorder %s28, %s44
      %p46 = scmp.eq.s32.totalorder %s20, 0
      %p47 = por %p45, %p46
      %s49 = sadd.s32 %s48, 1
      %p52 = scmp.eq.s32.totalorder %s14, 1
      %p53 = scmp.ne.s32.totalorder %s48, %s50
      %p54 = scmp.eq.s32.totalorder %s14, 0
      %p55 = por %p53, %p54
      %p56 = scmp.ne.s32.totalorder %s48, %s50
      %p57 = scmp.eq.s32.totalorder %s19, 1
      %p58 = por %p56, %p57
      %p59 = scmp.ne.s32.totalorder %s50, %s51
      %p60 = scmp.eq.s32.totalorder %s19, 0
      %p61 = por %p59, %p60
      %p62 = scmp.ne.s32.totalorder %s50, %s51
      %p63 = scmp.eq.s32.totalorder %s20, 1
      %p64 = por %p62, %p63
      %p66 = scmp.ne.s32.totalorder %s51, %s65
      %p67 = scmp.eq.s32.totalorder %s20, 0
      %p68 = por %p66, %p67
      %s70 = sadd.s32 %s69, 1
      %p73 = scmp.eq.s32.totalorder %s14, 1
      %p74 = scmp.ne.s32.totalorder %s69, %s71
      %p75 = scmp.eq.s32.totalorder %s14, 0
      %p76 = por %p74, %p75
      %p77 = scmp.ne.s32.totalorder %s69, %s71
      %p78 = scmp.eq.s32.totalorder %s19, 1
      %p79 = por %p77, %p78
      %p80 = scmp.ne.s32.totalorder %s71, %s72
      %p81 = scmp.eq.s32.totalorder %s19, 0
      %p82 = por %p80, %p81
      %p83 = scmp.ne.s32.totalorder %s71, %s72
      %p84 = scmp.eq.s32.totalorder %s20, 1
      %p85 = por %p83, %p84
      %p87 = scmp.ne.s32.totalorder %s72, %s86
      %p88 = scmp.eq.s32.totalorder %s20, 0
      %p89 = por %p87, %p88
      %p90 = scmp.le.s32.totalorder 1, %s14
      %p91 = scmp.lt.s32.totalorder %s14, 3
      %p92 = pnand %p90, %p91
      %p93 = pneg %p92
      // Predicated region
      $region9: #{tpu_custom_call.1} parent=5 // pred_check
        _
      $region10: #{tpu_custom_call.1} parent=5 // pred_check_branch
        %95 = sbr.rel (%p92) target = $region12
      $region11: #{tpu_custom_call.1} parent=5 // pred_region
        %s96 = ssub.s32 %s14, 1
      $region12: #{tpu_custom_call.1} parent=5 // pred_fallthru
        _
      %p97 = scmp.lt.s32.totalorder %s14, 2
      // Predicated region
      $region13: #{tpu_custom_call.1} parent=5 // pred_check
        %p98 = pneg %p97
      $region14: #{tpu_custom_call.1} parent=5 // pred_check_branch
        %100 = sbr.rel (%p98) target = $region16
      $region15: #{tpu_custom_call.1} parent=5 // pred_region
        // Predicated region
        $region17: #{tpu_custom_call.1} parent=15 // pred_check
          %p101 = pneg %p34
        $region18: #{tpu_custom_call.1} parent=15 // pred_check_branch
          %103 = sbr.rel (%p101) target = $region20
        $region19: #{tpu_custom_call.1} parent=15 // pred_region
          %s104 = sand.u32 %s24, 1
          %s105 = scalar_lea.sflag [#allocation5], %s104
          %s106 = sand.u32 %s24, 1
          %s107 = smul.addr %s106, 256
          %s108 = scalar_lea.vmem [#allocation4], %s107
          %s109 = smul.u32 8, %s14
          %s111 = ssub.s32 4096, 4096
          %112 = vsyncadd %s105, %s111
          %s113 = smul.addr %s109, 4
          %s114 = smul.addr %s113, 128
          %s115 = scalar_lea.hbm %s0, %s114
          %s116 = sshll.u32 %s108, 4
          %s117 = int_to_ptr.vmem [resolvable:$true] %s116
          %122 = dma.hbm_to_vmem [thread:$0]  %s115, 4096, %s117, %s105, 512, 512, 32
        $region20: #{tpu_custom_call.1} parent=15 // pred_fallthru
          _
      $region16: #{tpu_custom_call.1} parent=5 // pred_fallthru
        _
      %p123 = scmp.le.s32.totalorder 1, %s14
      %p124 = scmp.lt.s32.totalorder %s14, 3
      %p125 = pnand %p123, %p124
      %p126 = pneg %p125
      // Predicated region
      $region21: #{tpu_custom_call.1} parent=5 // pred_check
        _
      $region22: #{tpu_custom_call.1} parent=5 // pred_check_branch
        %128 = sbr.rel (%p125) target = $region24
      $region23: #{tpu_custom_call.1} parent=5 // pred_region
        %s129 = ssub.s32 %s14, 1
        %s130 = sand.u32 %s27, 1
        %s131 = scalar_lea.sflag [#allocation5], %s130
        %s132 = sand.u32 %s27, 1
        %s133 = smul.addr %s132, 256
        %s134 = scalar_lea.vmem [#allocation4], %s133
        // Predicated region
        $region25: #{tpu_custom_call.1} parent=23 // pred_check
          %p135 = pneg %p40
        $region26: #{tpu_custom_call.1} parent=23 // pred_check_branch
          %137 = sbr.rel (%p135) target = $region28
        $region27: #{tpu_custom_call.1} parent=23 // pred_region
          %138 = dma.done %s131, 4096
        $region28: #{tpu_custom_call.1} parent=23 // pred_fallthru
          _
        %s139 = sand.u32 %s27, 1
        %s140 = scalar_lea.sflag [#allocation5], %s139
        %s141 = sand.u32 %s27, 1
        %s142 = smul.addr %s141, 256
        %s143 = scalar_lea.vmem [#allocation4], %s142
        %p144 = pneg %p40
        %p145 = pneg %p37
        %p146 = pneg %p61
        %p147 = pneg %p58
        %p148 = pneg %p82
        %p149 = pneg %p79
        %s150 = smul.u32 8, %s19
        %v151 = vld [vmem:[%s134] sm:$0xff]
        %v152 = vld [vmem:[%s134 + $0x8] sm:$0xff]
        %v153 = vld [vmem:[%s134 + $0x10] sm:$0xff]
        %v154 = vld [vmem:[%s134 + $0x18] sm:$0xff]
        %v155 = vld [vmem:[%s134 + $0x20] sm:$0xff]
        %v156 = vld [vmem:[%s134 + $0x28] sm:$0xff]
        %v157 = vld [vmem:[%s134 + $0x30] sm:$0xff]
        %v158 = vld [vmem:[%s134 + $0x38] sm:$0xff]
        %v159 = vld [vmem:[%s134 + $0x40] sm:$0xff]
        %v160 = vld [vmem:[%s134 + $0x48] sm:$0xff]
        %v161 = vld [vmem:[%s134 + $0x50] sm:$0xff]
        %v162 = vld [vmem:[%s134 + $0x58] sm:$0xff]
        %v163 = vld [vmem:[%s134 + $0x60] sm:$0xff]
        %v164 = vld [vmem:[%s134 + $0x68] sm:$0xff]
        %v165 = vld [vmem:[%s134 + $0x70] sm:$0xff]
        %v166 = vld [vmem:[%s134 + $0x78] sm:$0xff]
        %v167 = vld [vmem:[%s134 + $0x80] sm:$0xff]
        %v168 = vld [vmem:[%s134 + $0x88] sm:$0xff]
        %v169 = vld [vmem:[%s134 + $0x90] sm:$0xff]
        %v170 = vld [vmem:[%s134 + $0x98] sm:$0xff]
        %v171 = vld [vmem:[%s134 + $0xa0] sm:$0xff]
        %v172 = vld [vmem:[%s134 + $0xa8] sm:$0xff]
        %v173 = vld [vmem:[%s134 + $0xb0] sm:$0xff]
        %v174 = vld [vmem:[%s134 + $0xb8] sm:$0xff]
        %v175 = vld [vmem:[%s134 + $0xc0] sm:$0xff]
        %v176 = vld [vmem:[%s134 + $0xc8] sm:$0xff]
        %v177 = vld [vmem:[%s134 + $0xd0] sm:$0xff]
        %v178 = vld [vmem:[%s134 + $0xd8] sm:$0xff]
        %v179 = vld [vmem:[%s134 + $0xe0] sm:$0xff]
        %v180 = vld [vmem:[%s134 + $0xe8] sm:$0xff]
        %v181 = vld [vmem:[%s134 + $0xf0] sm:$0xff]
        %v182 = vld [vmem:[%s134 + $0xf8] sm:$0xff]
        %v183 = vmin.f32 %v151, %v155
        %v184 = vmin.f32 %v183, %v159
        %v185 = vmin.f32 %v184, %v163
        %v186 = vmin.f32 %v185, %v167
        %v187 = vmin.f32 %v186, %v171
        %v188 = vmin.f32 %v187, %v175
        %v189 = vmin.f32 %v188, %v179
        %v190 = vrot.slane %v189, 4
        %v191 = vmin.f32 %v189, %v190
        %v192 = vrot.slane %v191, 2
        %v193 = vmin.f32 %v191, %v192
        %v194 = vrot.slane %v193, 1
        %v195 = vmin.f32 %v193, %v194
        %v196 = vmin.f32 %v152, %v156
        %v197 = vmin.f32 %v196, %v160
        %v198 = vmin.f32 %v197, %v164
        %v199 = vmin.f32 %v198, %v168
        %v200 = vmin.f32 %v199, %v172
        %v201 = vmin.f32 %v200, %v176
        %v202 = vmin.f32 %v201, %v180
        %v203 = vrot.slane %v202, 4
        %v204 = vmin.f32 %v202, %v203
        %v205 = vrot.slane %v204, 2
        %v206 = vmin.f32 %v204, %v205
        %v207 = vrot.slane %v206, 1
        %v208 = vmin.f32 %v206, %v207
        %v209 = vmin.f32 %v153, %v157
        %v210 = vmin.f32 %v209, %v161
        %v211 = vmin.f32 %v210, %v165
        %v212 = vmin.f32 %v211, %v169
        %v213 = vmin.f32 %v212, %v173
        %v214 = vmin.f32 %v213, %v177
        %v215 = vmin.f32 %v214, %v181
        %v216 = vrot.slane %v215, 4
        %v217 = vmin.f32 %v215, %v216
        %v218 = vrot.slane %v217, 2
        %v219 = vmin.f32 %v217, %v218
        %v220 = vrot.slane %v219, 1
        %v221 = vmin.f32 %v219, %v220
        %v222 = vmin.f32 %v154, %v158
        %v223 = vmin.f32 %v222, %v162
        %v224 = vmin.f32 %v223, %v166
        %v225 = vmin.f32 %v224, %v170
        %v226 = vmin.f32 %v225, %v174
        %v227 = vmin.f32 %v226, %v178
        %v228 = vmin.f32 %v227, %v182
        %v229 = vrot.slane %v228, 4
        %v230 = vmin.f32 %v228, %v229
        %v231 = vrot.slane %v230, 2
        %v232 = vmin.f32 %v230, %v231
        %v233 = vrot.slane %v232, 1
        %v234 = vmin.f32 %v232, %v233
        %v235 = vmax.f32 %v151, %v155
        %v236 = vmax.f32 %v235, %v159
        %v237 = vmax.f32 %v236, %v163
        %v238 = vmax.f32 %v237, %v167
        %v239 = vmax.f32 %v238, %v171
        %v240 = vmax.f32 %v239, %v175
        %v241 = vmax.f32 %v240, %v179
        %v242 = vrot.slane %v241, 4
        %v243 = vmax.f32 %v241, %v242
        %v244 = vrot.slane %v243, 2
        %v245 = vmax.f32 %v243, %v244
        %v246 = vrot.slane %v245, 1
        %v247 = vmax.f32 %v245, %v246
        %v248 = vmax.f32 %v152, %v156
        %v249 = vmax.f32 %v248, %v160
        %v250 = vmax.f32 %v249, %v164
        %v251 = vmax.f32 %v250, %v168
        %v252 = vmax.f32 %v251, %v172
        %v253 = vmax.f32 %v252, %v176
        %v254 = vmax.f32 %v253, %v180
        %v255 = vrot.slane %v254, 4
        %v256 = vmax.f32 %v254, %v255
        %v257 = vrot.slane %v256, 2
        %v258 = vmax.f32 %v256, %v257
        %v259 = vrot.slane %v258, 1
        %v260 = vmax.f32 %v258, %v259
        %v261 = vmax.f32 %v153, %v157
        %v262 = vmax.f32 %v261, %v161
        %v263 = vmax.f32 %v262, %v165
        %v264 = vmax.f32 %v263, %v169
        %v265 = vmax.f32 %v264, %v173
        %v266 = vmax.f32 %v265, %v177
        %v267 = vmax.f32 %v266, %v181
        %v268 = vrot.slane %v267, 4
        %v269 = vmax.f32 %v267, %v268
        %v270 = vrot.slane %v269, 2
        %v271 = vmax.f32 %v269, %v270
        %v272 = vrot.slane %v271, 1
        %v273 = vmax.f32 %v271, %v272
        %v274 = vmax.f32 %v154, %v158
        %v275 = vmax.f32 %v274, %v162
        %v276 = vmax.f32 %v275, %v166
        %v277 = vmax.f32 %v276, %v170
        %v278 = vmax.f32 %v277, %v174
        %v279 = vmax.f32 %v278, %v178
        %v280 = vmax.f32 %v279, %v182
        %v281 = vrot.slane %v280, 4
        %v282 = vmax.f32 %v280, %v281
        %v283 = vrot.slane %v282, 2
        %v284 = vmax.f32 %v282, %v283
        %v285 = vrot.slane %v284, 1
        %v286 = vmax.f32 %v284, %v285
        %p287 = scmp.eq.s32.totalorder %s19, 0
        // Predicated region
        $region29: #{tpu_custom_call.1} parent=23 // pred_check
          %p288 = pneg %p287
        $region30: #{tpu_custom_call.1} parent=23 // pred_check_branch
          %290 = sbr.rel (%p288) target = $region32
        $region31: #{tpu_custom_call.1} parent=23 // pred_region
          %v295 = vcombine.low %v195, %v208
          %v296 = vcombine.low %v221, %v234
          %v298 = vunpack.c.l.s4 1966171168
          %v299 = vunpack.c.0.s8 %v298
          %v300 = vlaneseq
          %v301 = vshrl.u32 %v300, 7
          %v302 = vsub.s32 %v299, %v301
          %v303 = vrot.slane %v295, %v302
          %v305 = vunpack.c.l.s4 1966171168
          %v306 = vunpack.c.0.s8 %v305
          %v307 = vlaneseq
          %v308 = vshrl.u32 %v307, 7
          %v309 = vsub.s32 %v306, %v308
          %v310 = vrot.slane %v296, %v309
          %v311 = vcombine.low %v303, %v310
          %v313 = vunpack.c.l.s4 1966171168
          %v314 = vunpack.c.0.s8 %v313
          %v315 = vlaneseq
          %v316 = vshrl.u32 %v315, 7
          %v317 = vsub.s32 %v314, %v316
          %v318 = vrot.slane %v311, %v317
          %v320 = vlaneseq
          %vm321 = vcmp.ge.s32.totalorder %v320, 0
          %vm322 = vcmp.lt.s32.totalorder %v320, 512
          %vm323 = vmand %vm321, %vm322
          %324 = vst.msk [vmem:[#allocation2] sm:$0xf] %vm323, %v318
          %v329 = vcombine.low %v247, %v260
          %v330 = vcombine.low %v273, %v286
          %v332 = vunpack.c.l.s4 1966171168
          %v333 = vunpack.c.0.s8 %v332
          %v334 = vlaneseq
          %v335 = vshrl.u32 %v334, 7
          %v336 = vsub.s32 %v333, %v335
          %v337 = vrot.slane %v329, %v336
          %v339 = vunpack.c.l.s4 1966171168
          %v340 = vunpack.c.0.s8 %v339
          %v341 = vlaneseq
          %v342 = vshrl.u32 %v341, 7
          %v343 = vsub.s32 %v340, %v342
          %v344 = vrot.slane %v330, %v343
          %v345 = vcombine.low %v337, %v344
          %v347 = vunpack.c.l.s4 1966171168
          %v348 = vunpack.c.0.s8 %v347
          %v349 = vlaneseq
          %v350 = vshrl.u32 %v349, 7
          %v351 = vsub.s32 %v348, %v350
          %v352 = vrot.slane %v345, %v351
          %354 = vst.msk [vmem:[#allocation3] sm:$0xf] %vm323, %v352
        $region32: #{tpu_custom_call.1} parent=23 // pred_fallthru
          _
        %p355 = scmp.gt.s32.totalorder %s19, 0
        // Predicated region
        $region33: #{tpu_custom_call.1} parent=23 // pred_check
          %p356 = pneg %p355
        $region34: #{tpu_custom_call.1} parent=23 // pred_check_branch
          %358 = sbr.rel (%p356) target = $region36
        $region35: #{tpu_custom_call.1} parent=23 // pred_region
          %v359 = vld [vmem:[#allocation2] sm:$0xf]
          %v364 = vcombine.low %v195, %v208
          %v365 = vcombine.low %v221, %v234
          %v367 = vunpack.c.l.s4 1966171168
          %v368 = vunpack.c.0.s8 %v367
          %v369 = vlaneseq
          %v370 = vshrl.u32 %v369, 7
          %v371 = vsub.s32 %v368, %v370
          %v372 = vrot.slane %v364, %v371
          %v374 = vunpack.c.l.s4 1966171168
          %v375 = vunpack.c.0.s8 %v374
          %v376 = vlaneseq
          %v377 = vshrl.u32 %v376, 7
          %v378 = vsub.s32 %v375, %v377
          %v379 = vrot.slane %v365, %v378
          %v380 = vcombine.low %v372, %v379
          %v382 = vunpack.c.l.s4 1966171168
          %v383 = vunpack.c.0.s8 %v382
          %v384 = vlaneseq
          %v385 = vshrl.u32 %v384, 7
          %v386 = vsub.s32 %v383, %v385
          %v387 = vrot.slane %v380, %v386
          %v389 = vmin.f32 %v359, %v387
          %v390 = vlaneseq
          %vm391 = vcmp.ge.s32.totalorder %v390, 0
          %vm392 = vcmp.lt.s32.totalorder %v390, 512
          %vm393 = vmand %vm391, %vm392
          %394 = vst.msk [vmem:[#allocation2] sm:$0xf] %vm393, %v389
          %v395 = vld [vmem:[#allocation3] sm:$0xf]
          %v400 = vcombine.low %v247, %v260
          %v401 = vcombine.low %v273, %v286
          %v403 = vunpack.c.l.s4 1966171168
          %v404 = vunpack.c.0.s8 %v403
          %v405 = vlaneseq
          %v406 = vshrl.u32 %v405, 7
          %v407 = vsub.s32 %v404, %v406
          %v408 = vrot.slane %v400, %v407
          %v410 = vunpack.c.l.s4 1966171168
          %v411 = vunpack.c.0.s8 %v410
          %v412 = vlaneseq
          %v413 = vshrl.u32 %v412, 7
          %v414 = vsub.s32 %v411, %v413
          %v415 = vrot.slane %v401, %v414
          %v416 = vcombine.low %v408, %v415
          %v418 = vunpack.c.l.s4 1966171168
          %v419 = vunpack.c.0.s8 %v418
          %v420 = vlaneseq
          %v421 = vshrl.u32 %v420, 7
          %v422 = vsub.s32 %v419, %v421
          %v423 = vrot.slane %v416, %v422
          %v425 = vmax.f32 %v395, %v423
          %426 = vst.msk [vmem:[#allocation3] sm:$0xf] %vm393, %v425
        $region36: #{tpu_custom_call.1} parent=23 // pred_fallthru
          _
        %p427 = scmp.eq.s32.totalorder %s19, 1
        // Predicated region
        $region37: #{tpu_custom_call.1} parent=23 // pred_check
          %p428 = pneg %p427
        $region38: #{tpu_custom_call.1} parent=23 // pred_check_branch
          %430 = sbr.rel (%p428) target = $region40
        $region39: #{tpu_custom_call.1} parent=23 // pred_region
          %v431 = vld [vmem:[#allocation2] sm:$0xf]
          %v432 = vlaneseq
          %vm433 = vcmp.ge.s32.totalorder %v432, 0
          %vm434 = vcmp.lt.s32.totalorder %v432, 512
          %vm435 = vmand %vm433, %vm434
          %436 = vst.msk [vmem:[#allocation7] sm:$0xf] %vm435, %v431
          %v437 = vld [vmem:[#allocation3] sm:$0xf]
          %438 = vst.msk [vmem:[#allocation8] sm:$0xf] %vm435, %v437
        $region40: #{tpu_custom_call.1} parent=23 // pred_fallthru
          _
        // Predicated region
        $region41: #{tpu_custom_call.1} parent=23 // pred_check
          %p439 = pneg %p58
        $region42: #{tpu_custom_call.1} parent=23 // pred_check_branch
          %441 = sbr.rel (%p439) target = $region44
        $region43: #{tpu_custom_call.1} parent=23 // pred_region
          %s443 = ssub.s32 64, 64
          %444 = vsyncadd [#allocation6], %s443
          %s446 = sshll.u32 [#allocation7], 4
          %s447 = int_to_ptr.vmem [resolvable:$true] %s446
          %449 = dma.vmem_to_hbm [thread:$0]  %s447, 64, %s1, [#allocation6]
        $region44: #{tpu_custom_call.1} parent=23 // pred_fallthru
          _
        // Predicated region
        $region45: #{tpu_custom_call.1} parent=23 // pred_check
          %p450 = pneg %p79
        $region46: #{tpu_custom_call.1} parent=23 // pred_check_branch
          %452 = sbr.rel (%p450) target = $region48
        $region47: #{tpu_custom_call.1} parent=23 // pred_region
          %s454 = ssub.s32 64, 64
          %455 = vsyncadd [#allocation9], %s454
          %s457 = sshll.u32 [#allocation8], 4
          %s458 = int_to_ptr.vmem [resolvable:$true] %s457
          %460 = dma.vmem_to_hbm [thread:$0]  %s458, 64, %s2, [#allocation9]
        $region48: #{tpu_custom_call.1} parent=23 // pred_fallthru
          _
        // Predicated region
        $region49: #{tpu_custom_call.1} parent=23 // pred_check
          %p461 = pneg %p58
        $region50: #{tpu_custom_call.1} parent=23 // pred_check_branch
          %463 = sbr.rel (%p461) target = $region52
        $region51: #{tpu_custom_call.1} parent=23 // pred_region
          %464 = dma.done [#allocation6], 64
        $region52: #{tpu_custom_call.1} parent=23 // pred_fallthru
          _
        // Predicated region
        $region53: #{tpu_custom_call.1} parent=23 // pred_check
          %p465 = pneg %p79
        $region54: #{tpu_custom_call.1} parent=23 // pred_check_branch
          %467 = sbr.rel (%p465) target = $region56
        $region55: #{tpu_custom_call.1} parent=23 // pred_region
          %468 = dma.done [#allocation9], 64
        $region56: #{tpu_custom_call.1} parent=23 // pred_fallthru
          _
      $region24: #{tpu_custom_call.1} parent=5 // pred_fallthru
        _
      %p469 = scmp.le.s32.totalorder 2, %s14
      // Predicated region
      $region57: #{tpu_custom_call.1} parent=5 // pred_check
        %p470 = pneg %p469
      $region58: #{tpu_custom_call.1} parent=5 // pred_check_branch
        %472 = sbr.rel (%p470) target = $region60
      $region59: #{tpu_custom_call.1} parent=5 // pred_region
        %s473 = ssub.s32 %s14, 2
      $region60: #{tpu_custom_call.1} parent=5 // pred_fallthru
        _
    $region6: #{tpu_custom_call.1} parent=1 // loop_footer
      %s18 = sadd.s32 1, %s14
    $region7: #{tpu_custom_call.1} parent=1 // loop_footer_branch
      %13 = sbr.rel target = $region3
    $region8: #{tpu_custom_call.1} parent=1 // loop_exit
      _
    %474 = vsyncpa [#allocation5], 1
    %s475 = scalar_lea.sflag [#allocation5], 1
    %476 = vsyncpa %s475, 1
    %477 = vsyncpa [#allocation6], 1
    %s478 = scalar_lea.sflag [#allocation6], 1
    %479 = vsyncpa %s478, 1
    %480 = vsyncpa [#allocation9], 1

</llo_original>
